<compile_context>
chip_gen: v6e
topology: v6e:2x2x1
jax: 0.10.0
libtpu: 0.0.40
codegen_flags: <defaults>
</compile_context>

<pallas_src>
import functools

import jax
import jax.numpy as jnp
from jax import lax
from jax.experimental import pallas as pl
from jax.experimental.pallas import tpu as pltpu


# ----------------------------- Pallas kernel ------------------------------- #
def _temporal_block_kernel(*refs, kernel_size, dilation, pad, has_downsample,
                           matmul_dtype):
    if has_downsample:
        (x_ref, w1_ref, b1_ref, w2_ref, b2_ref, wd_ref, bd_ref,
         o_ref, xc_ref, y1c_ref) = refs
    else:
        (x_ref, w1_ref, b1_ref, w2_ref, b2_ref,
         o_ref, xc_ref, y1c_ref) = refs
        wd_ref = bd_ref = None

    K = kernel_size
    TL = o_ref.shape[1]

    # Reset the causal carries at the first time tile of each batch element.
    @pl.when(pl.program_id(1) == 0)
    def _():
        xc_ref[...] = jnp.zeros_like(xc_ref)
        y1c_ref[...] = jnp.zeros_like(y1c_ref)

    x_tile = x_ref[...]                                          # (Cin, TL)

    # ---- conv1: im2col over the K dilated taps -> a single wide matmul ----
    xp = jnp.concatenate([xc_ref[...], x_tile], axis=1) if pad > 0 else x_tile
    taps1 = [xp[:, k * dilation: k * dilation + TL] for k in range(K)]
    slab1 = jnp.concatenate(taps1, axis=0) if K > 1 else taps1[0]  # (K*Cin, TL)
    acc1 = jnp.dot(w1_ref[...], slab1, preferred_element_type=jnp.float32)
    y1_f32 = jnp.maximum(acc1 + b1_ref[...], 0.0)                # (Cout, TL) f32
    # TODO(synk): nn.Dropout is stochastic only in training; forward here uses
    #             eval/inference semantics (identity).
    y1 = y1_f32.astype(matmul_dtype)

    # ---- conv2: same im2col fold over the (causally carried) conv1 output ----
    y1p = jnp.concatenate([y1c_ref[...], y1], axis=1) if pad > 0 else y1
    taps2 = [y1p[:, k * dilation: k * dilation + TL] for k in range(K)]
    slab2 = jnp.concatenate(taps2, axis=0) if K > 1 else taps2[0]  # (K*Cout, TL)
    acc2 = jnp.dot(w2_ref[...], slab2, preferred_element_type=jnp.float32)
    y2 = jnp.maximum(acc2 + b2_ref[...], 0.0)                    # (Cout, TL) f32

    # ---- residual (optional 1x1 conv downsample) + final ReLU ----
    if has_downsample:
        res = jnp.dot(wd_ref[...], x_tile,
                      preferred_element_type=jnp.float32) + bd_ref[...]
    else:
        res = x_tile.astype(jnp.float32)
    o_ref[...] = jnp.maximum(y2 + res, 0.0).astype(o_ref.dtype)

    # ---- update causal carries (last `pad` columns) for the next time tile ----
    if pad > 0:
        xc_ref[...] = xp[:, TL: TL + pad]
        y1c_ref[...] = y1p[:, TL: TL + pad]


# ------------------------------ wrapper ------------------------------------ #
def _pick_time_tile(L, Cin, Cout, K, pad, *, vmem_budget_bytes=40 << 20):
    """Largest 128-multiple time tile whose live VMEM fits a v7x-safe budget."""
    def est(TL):
        b = 4  # conservative: f32 element size everywhere
        x_blk = Cin * TL * b * 2                       # input tile, 2 buffers
        o_blk = Cout * TL * b * 2                      # output tile, 2 buffers
        w = (Cout * K * Cin + Cout * K * Cout + Cout * Cin + 4 * Cout) * b * 2
        carries = (Cin + Cout) * max(pad, 1) * b
        temps = (K * Cin + K * Cout + 4 * Cout + 2 * Cin) * (TL + pad) * b
        return x_blk + o_blk + w + carries + temps

    if L <= 128:
        return L, est(L)
    for TL in (2048, 1024, 512, 256, 128):
        if TL <= L and est(TL) <= vmem_budget_bytes:
            return TL, est(TL)
    return 128, est(128)


def temporal_block_forward(x, params, *, kernel_size, stride, dilation, padding,
                           matmul_dtype=jnp.bfloat16):
    """x: (N, C_in, L) float32, PyTorch NCL layout. Returns (N, C_out, L) f32."""
    assert stride == 1, "TemporalBlock kernel implemented for stride == 1 (TCN default)"
    assert padding == (kernel_size - 1) * dilation, "causal TCN padding expected"

    N, Cin, L = x.shape
    w1, b1 = params["w1"], params["b1"]                # (Cout, Cin, K), (Cout,)
    w2, b2 = params["w2"], params["b2"]                # (Cout, Cout, K), (Cout,)
    Cout = w1.shape[0]
    K = kernel_size
    pad = padding
    has_downsample = Cin != Cout

    # im2col weights: (Cout, K*C) so each conv is one wide-contraction matmul.
    w1_flat = jnp.transpose(w1, (0, 2, 1)).reshape(Cout, K * Cin).astype(matmul_dtype)
    w2_flat = jnp.transpose(w2, (0, 2, 1)).reshape(Cout, K * Cout).astype(matmul_dtype)
    b1c = b1.reshape(Cout, 1).astype(jnp.float32)
    b2c = b2.reshape(Cout, 1).astype(jnp.float32)

    x_in = x.astype(matmul_dtype)                      # bf16 halves HBM traffic

    TL, est_bytes = _pick_time_tile(L, Cin, Cout, K, pad)
    n_t = pl.cdiv(L, TL)

    in_specs = [
        pl.BlockSpec((pl.Squeezed(), Cin, TL), lambda n, t: (n, 0, t)),
        pl.BlockSpec((Cout, K * Cin), lambda n, t: (0, 0)),
        pl.BlockSpec((Cout, 1), lambda n, t: (0, 0)),
        pl.BlockSpec((Cout, K * Cout), lambda n, t: (0, 0)),
        pl.BlockSpec((Cout, 1), lambda n, t: (0, 0)),
    ]
    args = [x_in, w1_flat, b1c, w2_flat, b2c]
    if has_downsample:
        wd = params["wd"][:, :, 0].astype(matmul_dtype)            # (Cout, Cin)
        bd = params["bd"].reshape(Cout, 1).astype(jnp.float32)
        in_specs += [pl.BlockSpec((Cout, Cin), lambda n, t: (0, 0)),
                     pl.BlockSpec((Cout, 1), lambda n, t: (0, 0))]
        args += [wd, bd]

    kernel = functools.partial(
        _temporal_block_kernel, kernel_size=K, dilation=dilation, pad=pad,
        has_downsample=has_downsample, matmul_dtype=matmul_dtype)

    vmem_limit = int(min(max(2 * est_bytes, 32 << 20), 56 << 20))

    out = pl.pallas_call(
        kernel,
        out_shape=jax.ShapeDtypeStruct((N, Cout, L), jnp.float32),
        grid_spec=pltpu.PrefetchScalarGridSpec(
            num_scalar_prefetch=0,
            grid=(N, n_t),
            in_specs=in_specs,
            out_specs=pl.BlockSpec((pl.Squeezed(), Cout, TL),
                                   lambda n, t: (n, 0, t)),
            scratch_shapes=[pltpu.VMEM((Cin, max(pad, 1)), matmul_dtype),
                            pltpu.VMEM((Cout, max(pad, 1)), matmul_dtype)],
        ),
        compiler_params=pltpu.CompilerParams(
            dimension_semantics=("parallel", "arbitrary"),
            vmem_limit_bytes=vmem_limit),
    )(*args)
    return out


# --------------------- deterministic parameter setup ----------------------- #
def init_params(key, in_channels, out_channels, kernel_size):
    """Emulates weight_norm(Conv1d) parametrization: W = g * v / ||v||_(in,k)."""
    ks = jax.random.split(key, 8)
    v1 = jax.random.normal(ks[0], (out_channels, in_channels, kernel_size), jnp.float32) * 0.3
    g1 = jax.random.uniform(ks[1], (out_channels, 1, 1), jnp.float32, minval=0.5, maxval=1.5)
    b1 = jax.random.normal(ks[2], (out_channels,), jnp.float32) * 0.1
    v2 = jax.random.normal(ks[3], (out_channels, out_channels, kernel_size), jnp.float32) * 0.3
    g2 = jax.random.uniform(ks[4], (out_channels, 1, 1), jnp.float32, minval=0.5, maxval=1.5)
    b2 = jax.random.normal(ks[5], (out_channels,), jnp.float32) * 0.1
    w1 = g1 * v1 / jnp.sqrt(jnp.sum(v1 * v1, axis=(1, 2), keepdims=True))
    w2 = g2 * v2 / jnp.sqrt(jnp.sum(v2 * v2, axis=(1, 2), keepdims=True))
    params = {"w1": w1, "b1": b1, "w2": w2, "b2": b2}
    if in_channels != out_channels:
        params["wd"] = jax.random.normal(ks[6], (out_channels, in_channels, 1), jnp.float32) * 0.3
        params["bd"] = jax.random.normal(ks[7], (out_channels,), jnp.float32) * 0.1
    return params


# ----------------------- pure-JAX reference (check) ------------------------ #
def _conv1d_ref(x, w, b, dilation, padding):
    out = lax.conv_general_dilated(
        x, w, window_strides=(1,), padding=[(padding, padding)],
        rhs_dilation=(dilation,), dimension_numbers=("NCH", "OIH", "NCH"))
    return out + b[None, :, None]


def ref_forward(x, params, *, dilation, padding):
    y = _conv1d_ref(x, params["w1"], params["b1"], dilation, padding)
    if padding > 0:
        y = y[:, :, :-padding]
    y = jnp.maximum(y, 0.0)
    y = _conv1d_ref(y, params["w2"], params["b2"], dilation, padding)
    if padding > 0:
        y = y[:, :, :-padding]
    y = jnp.maximum(y, 0.0)
    if "wd" in params:
        res = _conv1d_ref(x, params["wd"], params["bd"], 1, 0)
    else:
        res = x
    return jnp.maximum(y + res, 0.0)


# --------------------------------- main ------------------------------------ #
if __name__ == "__main__":
    K, STRIDE, DIL = 3, 1, 2
    PAD = (K - 1) * DIL           # = 4 (causal TCN padding)
    DROPOUT = 0.1                 # identity in forward/eval

    key = jax.random.PRNGKey(0)
    kx, kp, kq = jax.random.split(key, 3)

    # Case 1: Cin != Cout (1x1 downsample on the residual path).
    N, C_IN, C_OUT, L = 2, 4, 8, 16
    x = jax.random.normal(kx, (N, C_IN, L), jnp.float32)
    params = init_params(kp, C_IN, C_OUT, K)
    ref = ref_forward(x, params, dilation=DIL, padding=PAD)

    out_f32 = temporal_block_forward(x, params, kernel_size=K, stride=STRIDE,
                                     dilation=DIL, padding=PAD,
                                     matmul_dtype=jnp.float32)
    out_f32 = jax.block_until_ready(out_f32)
    assert out_f32.shape == (N, C_OUT, L)
    assert jnp.allclose(out_f32, ref, atol=1e-5, rtol=1e-5), "f32 mismatch vs reference"

    out_bf16 = temporal_block_forward(x, params, kernel_size=K, stride=STRIDE,
                                      dilation=DIL, padding=PAD,
                                      matmul_dtype=jnp.bfloat16)
    out_bf16 = jax.block_until_ready(out_bf16)
    assert out_bf16.shape == (N, C_OUT, L)
    assert jnp.allclose(out_bf16, ref, atol=5e-2, rtol=5e-2), "bf16 mismatch vs reference"

    # Case 2: Cin == Cout (identity residual; conditional kernel signature).
    C2 = 8
    x2 = jax.random.normal(kq, (N, C2, L), jnp.float32)
    params2 = init_params(jax.random.fold_in(kp, 1), C2, C2, K)
    ref2 = ref_forward(x2, params2, dilation=DIL, padding=PAD)
    out2 = jax.block_until_ready(
        temporal_block_forward(x2, params2, kernel_size=K, stride=STRIDE,
                               dilation=DIL, padding=PAD,
                               matmul_dtype=jnp.float32))
    assert jnp.allclose(out2, ref2, atol=1e-5, rtol=1e-5), "identity-residual mismatch"

    print("KERNEL_OK")
</pallas_src>

<mosaic_0001>
module attributes {stable_mosaic.version = 11 : i64} {
  func.func @_temporal_block_kernel(%arg0: i32, %arg1: i32, %arg2: memref<1x4x16xf32, #tpu.memory_space<vmem>>, %arg3: memref<8x12xf32, #tpu.memory_space<vmem>>, %arg4: memref<8x1xf32, #tpu.memory_space<vmem>>, %arg5: memref<8x24xf32, #tpu.memory_space<vmem>>, %arg6: memref<8x1xf32, #tpu.memory_space<vmem>>, %arg7: memref<8x4xf32, #tpu.memory_space<vmem>>, %arg8: memref<8x1xf32, #tpu.memory_space<vmem>>, %arg9: memref<1x8x16xf32, #tpu.memory_space<vmem>>, %arg10: memref<4x4xf32, #tpu.memory_space<vmem>>, %arg11: memref<8x4xf32, #tpu.memory_space<vmem>>) attributes {dimension_semantics = [#tpu.dimension_semantics<parallel>, #tpu.dimension_semantics<arbitrary>], iteration_bounds = array<i64: 2, 1>, scalar_prefetch = 0 : i64, scratch_operands = 2 : i64, tpu.core_type = #tpu.core_type<tc>, window_params = [{transform_indices = @transform_0, window_bounds = array<i64: 1, 4, 16>}, {pipeline_mode = #tpu.pipeline_mode<synchronous>, transform_indices = @transform_1, window_bounds = array<i64: 8, 12>}, {pipeline_mode = #tpu.pipeline_mode<synchronous>, transform_indices = @transform_2, window_bounds = array<i64: 8, 1>}, {pipeline_mode = #tpu.pipeline_mode<synchronous>, transform_indices = @transform_3, window_bounds = array<i64: 8, 24>}, {pipeline_mode = #tpu.pipeline_mode<synchronous>, transform_indices = @transform_4, window_bounds = array<i64: 8, 1>}, {pipeline_mode = #tpu.pipeline_mode<synchronous>, transform_indices = @transform_5, window_bounds = array<i64: 8, 4>}, {pipeline_mode = #tpu.pipeline_mode<synchronous>, transform_indices = @transform_6, window_bounds = array<i64: 8, 1>}, {transform_indices = @transform_7, window_bounds = array<i64: 1, 8, 16>}]} {
    %c0_i32 = arith.constant 0 : i32
    %0 = arith.cmpi eq, %arg1, %c0_i32 : i32
    %1 = arith.extui %0 : i1 to i32
    %c0_i32_0 = arith.constant 0 : i32
    %2 = arith.cmpi ne, %1, %c0_i32_0 : i32
    scf.if %2 {
      %cst_31 = arith.constant 0.000000e+00 : f32
      %46 = vector.broadcast %cst_31 : f32 to vector<4x4xf32>
      %c0_32 = arith.constant 0 : index
      %c0_33 = arith.constant 0 : index
      %47 = vector.load %arg10[%c0_32, %c0_33] : memref<4x4xf32, #tpu.memory_space<vmem>>, vector<4x4xf32>
      tpu.vector_store %arg10[%c0_32, %c0_33], %46 {strides = array<i32>} : memref<4x4xf32, #tpu.memory_space<vmem>>, vector<4x4xf32>,
      %cst_34 = arith.constant 0.000000e+00 : f32
      %48 = vector.broadcast %cst_34 : f32 to vector<8x4xf32>
      %c0_35 = arith.constant 0 : index
      %c0_36 = arith.constant 0 : index
      %49 = vector.load %arg11[%c0_35, %c0_36] : memref<8x4xf32, #tpu.memory_space<vmem>>, vector<8x4xf32>
      tpu.vector_store %arg11[%c0_35, %c0_36], %48 {strides = array<i32>} : memref<8x4xf32, #tpu.memory_space<vmem>>, vector<8x4xf32>,
    } else {
    }
    %c0 = arith.constant 0 : index
    %c0_1 = arith.constant 0 : index
    %c0_2 = arith.constant 0 : index
    %3 = vector.load %arg2[%c0, %c0_1, %c0_2] : memref<1x4x16xf32, #tpu.memory_space<vmem>>, vector<1x4x16xf32>
    %4 = vector.shape_cast %3 : vector<1x4x16xf32> to vector<4x16xf32>
    %c0_3 = arith.constant 0 : index
    %c0_4 = arith.constant 0 : index
    %5 = vector.load %arg10[%c0_3, %c0_4] : memref<4x4xf32, #tpu.memory_space<vmem>>, vector<4x4xf32>
    %6 = tpu.concatenate %5, %4 in 1 : vector<4x4xf32>, vector<4x16xf32> -> vector<4x20xf32>
    %7 = vector.extract_strided_slice %6 {offsets = [0, 0], sizes = [4, 16], strides = [1, 1]} : vector<4x20xf32> to vector<4x16xf32>
    %8 = vector.extract_strided_slice %6 {offsets = [0, 2], sizes = [4, 16], strides = [1, 1]} : vector<4x20xf32> to vector<4x16xf32>
    %9 = vector.extract_strided_slice %6 {offsets = [0, 4], sizes = [4, 16], strides = [1, 1]} : vector<4x20xf32> to vector<4x16xf32>
    %10 = tpu.concatenate %7, %8, %9 in 0 : vector<4x16xf32>, vector<4x16xf32>, vector<4x16xf32> -> vector<12x16xf32>
    %c0_5 = arith.constant 0 : index
    %c0_6 = arith.constant 0 : index
    %11 = vector.load %arg3[%c0_5, %c0_6] : memref<8x12xf32, #tpu.memory_space<vmem>>, vector<8x12xf32>
    %cst = arith.constant dense<0.000000e+00> : vector<8x16xf32>
    %12 = tpu.matmul %11, %10, %cst {dimension_numbers = #tpu.dot_dimension_numbers<[1], [0], [0], [1], [0, 0, 1, 1], [], []>} : vector<8x12xf32>, vector<12x16xf32>, vector<8x16xf32> -> vector<8x16xf32>
    %c0_7 = arith.constant 0 : index
    %c0_8 = arith.constant 0 : index
    %13 = vector.load %arg4[%c0_7, %c0_8] : memref<8x1xf32, #tpu.memory_space<vmem>>, vector<8x1xf32>
    %14 = vector.broadcast %13 : vector<8x1xf32> to vector<8x16xf32>
    %15 = arith.addf %12, %14 : vector<8x16xf32>
    %cst_9 = arith.constant 0.000000e+00 : f32
    %16 = vector.broadcast %cst_9 : f32 to vector<8x16xf32>
    %17 = arith.maximumf %15, %16 : vector<8x16xf32>
    %c0_10 = arith.constant 0 : index
    %c0_11 = arith.constant 0 : index
    %18 = vector.load %arg11[%c0_10, %c0_11] : memref<8x4xf32, #tpu.memory_space<vmem>>, vector<8x4xf32>
    %19 = tpu.concatenate %18, %17 in 1 : vector<8x4xf32>, vector<8x16xf32> -> vector<8x20xf32>
    %20 = vector.extract_strided_slice %19 {offsets = [0, 0], sizes = [8, 16], strides = [1, 1]} : vector<8x20xf32> to vector<8x16xf32>
    %21 = vector.extract_strided_slice %19 {offsets = [0, 2], sizes = [8, 16], strides = [1, 1]} : vector<8x20xf32> to vector<8x16xf32>
    %22 = vector.extract_strided_slice %19 {offsets = [0, 4], sizes = [8, 16], strides = [1, 1]} : vector<8x20xf32> to vector<8x16xf32>
    %23 = tpu.concatenate %20, %21, %22 in 0 : vector<8x16xf32>, vector<8x16xf32>, vector<8x16xf32> -> vector<24x16xf32>
    %c0_12 = arith.constant 0 : index
    %c0_13 = arith.constant 0 : index
    %24 = vector.load %arg5[%c0_12, %c0_13] : memref<8x24xf32, #tpu.memory_space<vmem>>, vector<8x24xf32>
    %cst_14 = arith.constant dense<0.000000e+00> : vector<8x16xf32>
    %25 = tpu.matmul %24, %23, %cst_14 {dimension_numbers = #tpu.dot_dimension_numbers<[1], [0], [0], [1], [0, 0, 1, 1], [], []>} : vector<8x24xf32>, vector<24x16xf32>, vector<8x16xf32> -> vector<8x16xf32>
    %c0_15 = arith.constant 0 : index
    %c0_16 = arith.constant 0 : index
    %26 = vector.load %arg6[%c0_15, %c0_16] : memref<8x1xf32, #tpu.memory_space<vmem>>, vector<8x1xf32>
    %27 = vector.broadcast %26 : vector<8x1xf32> to vector<8x16xf32>
    %28 = arith.addf %25, %27 : vector<8x16xf32>
    %cst_17 = arith.constant 0.000000e+00 : f32
    %29 = vector.broadcast %cst_17 : f32 to vector<8x16xf32>
    %30 = arith.maximumf %28, %29 : vector<8x16xf32>
    %c0_18 = arith.constant 0 : index
    %c0_19 = arith.constant 0 : index
    %31 = vector.load %arg7[%c0_18, %c0_19] : memref<8x4xf32, #tpu.memory_space<vmem>>, vector<8x4xf32>
    %cst_20 = arith.constant dense<0.000000e+00> : vector<8x16xf32>
    %32 = tpu.matmul %31, %4, %cst_20 {dimension_numbers = #tpu.dot_dimension_numbers<[1], [0], [0], [1], [0, 0, 1, 1], [], []>} : vector<8x4xf32>, vector<4x16xf32>, vector<8x16xf32> -> vector<8x16xf32>
    %c0_21 = arith.constant 0 : index
    %c0_22 = arith.constant 0 : index
    %33 = vector.load %arg8[%c0_21, %c0_22] : memref<8x1xf32, #tpu.memory_space<vmem>>, vector<8x1xf32>
    %34 = vector.broadcast %33 : vector<8x1xf32> to vector<8x16xf32>
    %35 = arith.addf %32, %34 : vector<8x16xf32>
    %36 = arith.addf %30, %35 : vector<8x16xf32>
    %cst_23 = arith.constant 0.000000e+00 : f32
    %37 = vector.broadcast %cst_23 : f32 to vector<8x16xf32>
    %38 = arith.maximumf %36, %37 : vector<8x16xf32>
    %c0_24 = arith.constant 0 : index
    %c0_25 = arith.constant 0 : index
    %c0_26 = arith.constant 0 : index
    %39 = vector.load %arg9[%c0_24, %c0_25, %c0_26] : memref<1x8x16xf32, #tpu.memory_space<vmem>>, vector<1x8x16xf32>
    %40 = vector.shape_cast %39 : vector<1x8x16xf32> to vector<8x16xf32>
    %41 = vector.shape_cast %38 : vector<8x16xf32> to vector<1x8x16xf32>
    tpu.vector_store %arg9[%c0_24, %c0_25, %c0_26], %41 {strides = array<i32>} : memref<1x8x16xf32, #tpu.memory_space<vmem>>, vector<1x8x16xf32>,
    %42 = vector.extract_strided_slice %6 {offsets = [0, 16], sizes = [4, 4], strides = [1, 1]} : vector<4x20xf32> to vector<4x4xf32>
    %c0_27 = arith.constant 0 : index
    %c0_28 = arith.constant 0 : index
    %43 = vector.load %arg10[%c0_27, %c0_28] : memref<4x4xf32, #tpu.memory_space<vmem>>, vector<4x4xf32>
    tpu.vector_store %arg10[%c0_27, %c0_28], %42 {strides = array<i32>} : memref<4x4xf32, #tpu.memory_space<vmem>>, vector<4x4xf32>,
    %44 = vector.extract_strided_slice %19 {offsets = [0, 16], sizes = [8, 4], strides = [1, 1]} : vector<8x20xf32> to vector<8x4xf32>
    %c0_29 = arith.constant 0 : index
    %c0_30 = arith.constant 0 : index
    %45 = vector.load %arg11[%c0_29, %c0_30] : memref<8x4xf32, #tpu.memory_space<vmem>>, vector<8x4xf32>
    tpu.vector_store %arg11[%c0_29, %c0_30], %44 {strides = array<i32>} : memref<8x4xf32, #tpu.memory_space<vmem>>, vector<8x4xf32>,
    return
  }
  func.func @transform_0(%arg0: i32, %arg1: i32) -> (i32, i32, i32) {
    %c0_i32 = arith.constant 0 : i32
    %c0_i32_0 = arith.constant 0 : i32
    return %arg0, %c0_i32, %arg1 : i32, i32, i32
  }
  func.func @transform_1(%arg0: i32, %arg1: i32) -> (i32, i32) {
    %c0_i32 = arith.constant 0 : i32
    %c0_i32_0 = arith.constant 0 : i32
    %c0_i32_1 = arith.constant 0 : i32
    return %c0_i32, %c0_i32_0 : i32, i32
  }
  func.func @transform_2(%arg0: i32, %arg1: i32) -> (i32, i32) {
    %c0_i32 = arith.constant 0 : i32
    %c0_i32_0 = arith.constant 0 : i32
    %c0_i32_1 = arith.constant 0 : i32
    return %c0_i32, %c0_i32_0 : i32, i32
  }
  func.func @transform_3(%arg0: i32, %arg1: i32) -> (i32, i32) {
    %c0_i32 = arith.constant 0 : i32
    %c0_i32_0 = arith.constant 0 : i32
    %c0_i32_1 = arith.constant 0 : i32
    return %c0_i32, %c0_i32_0 : i32, i32
  }
  func.func @transform_4(%arg0: i32, %arg1: i32) -> (i32, i32) {
    %c0_i32 = arith.constant 0 : i32
    %c0_i32_0 = arith.constant 0 : i32
    %c0_i32_1 = arith.constant 0 : i32
    return %c0_i32, %c0_i32_0 : i32, i32
  }
  func.func @transform_5(%arg0: i32, %arg1: i32) -> (i32, i32) {
    %c0_i32 = arith.constant 0 : i32
    %c0_i32_0 = arith.constant 0 : i32
    %c0_i32_1 = arith.constant 0 : i32
    return %c0_i32, %c0_i32_0 : i32, i32
  }
  func.func @transform_6(%arg0: i32, %arg1: i32) -> (i32, i32) {
    %c0_i32 = arith.constant 0 : i32
    %c0_i32_0 = arith.constant 0 : i32
    %c0_i32_1 = arith.constant 0 : i32
    return %c0_i32, %c0_i32_0 : i32, i32
  }
  func.func @transform_7(%arg0: i32, %arg1: i32) -> (i32, i32, i32) {
    %c0_i32 = arith.constant 0 : i32
    %c0_i32_0 = arith.constant 0 : i32
    return %arg0, %c0_i32, %arg1 : i32, i32, i32
  }
}

</mosaic_0001>

<llo_original>
// kernel: tpu_custom_call.1
$region0: #{tpu_custom_call.1}
  #allocation0 [shape = 'u32[]', space=smem, size = 0x4, offset = 0x4, fixed_abs, tag = 'smem constant byte address 0x4 - core index']
  #allocation1 [shape = 'u32[144,128]{1,0:T(1,128)}', space=vmem, size = 0x12000, scoped, tag = 'internal scratch']
  #allocation2 [shape = 'f32[4,4]{1,0:T(4,128)}', space=vmem, size = 0x800, scoped, tag = 'scratch operand']
  #allocation3 [shape = 'f32[8,4]{1,0:T(8,128)}', space=vmem, size = 0x1000, scoped, tag = 'scratch operand']
  %s0 = inlined_call_operand.vmem [shape: f32[2,4,16], index: 0, kind: input, shape index: {}]
  %s1 = inlined_call_operand.vmem [shape: f32[8,12], index: 1, kind: input, shape index: {}]
  %s2 = inlined_call_operand.vmem [shape: f32[8,1], index: 2, kind: input, shape index: {}]
  %s3 = inlined_call_operand.vmem [shape: f32[8,24], index: 3, kind: input, shape index: {}]
  %s4 = inlined_call_operand.vmem [shape: f32[8,1], index: 4, kind: input, shape index: {}]
  %s5 = inlined_call_operand.vmem [shape: f32[8,4], index: 5, kind: input, shape index: {}]
  %s6 = inlined_call_operand.vmem [shape: f32[8,1], index: 6, kind: input, shape index: {}]
  %s7 = inlined_call_operand.hbm [shape: f32[2,8,16], index: 7, kind: output, shape index: {}]
  %s8 = sld [smem:[#allocation0]]
  $region65: #{tpu_custom_call.1} parent=0
    _
  %s10 = ssub.s32 1, %s8
  %s11 = scalar_select 0, %s10, %s8
  $region1: #{tpu_custom_call.1} parent=0
    #allocation4 [shape = 'u8[8192]{0}', space=vmem, size = 0x2000, scoped, tag = 'output window, operand 0']
    #allocation5 [shape = 's32[2]{0}', space=sflag, size = 0x8, scoped, tag = 'scoped memory for tpu_custom_call.1']
    %12 = vsyncpa [#allocation5], 0
    %s13 = scalar_lea.sflag [#allocation5], 1
    %14 = vsyncpa %s13, 0
    loop: start=0, step=1, limit=4
    $region2: #{tpu_custom_call.1} parent=1 // loop_pre_header
      _
    $region3: #{tpu_custom_call.1} parent=1 // loop_header
      %s16 = sphi 0, %s20
      %p17 = scmp.ge.s32.totalorder %s16, 4
      %s23 = sphi 0, %s35
      %s24 = sphi 0, %s31
      %s25 = sphi 0, %s23
      %s26 = sphi 0, %s24
      %s27 = sphi 0, %s25
      %s28 = sphi 0, %s26
      %s40 = sphi 0, %s42
      %s43 = sphi 0, %s40
      %s44 = sphi 0, %s43
      %s60 = sphi 0, %s44
      %s64 = sphi 0, %s64
      %s66 = sphi 0, %s64
      %s67 = sphi 0, %s66
      %s81 = sphi 0, %s67
      %s85 = sphi 0, %s85
      %s87 = sphi 0, %s85
      %s88 = sphi 0, %s87
      %s102 = sphi 0, %s88
      %s106 = sphi 0, %s106
      %s108 = sphi 0, %s106
      %s109 = sphi 0, %s108
      %s123 = sphi 0, %s109
      %s127 = sphi 0, %s127
      %s129 = sphi 0, %s127
      %s130 = sphi 0, %s129
      %s144 = sphi 0, %s130
      %s148 = sphi 0, %s148
      %s150 = sphi 0, %s148
      %s151 = sphi 0, %s150
      %s165 = sphi 0, %s151
      %s169 = sphi 0, %s169
      %s171 = sphi 0, %s169
      %s172 = sphi 0, %s171
      %s186 = sphi 0, %s172
      %s194 = sphi 0, %s196
      %s197 = sphi 0, %s194
      %s198 = sphi 0, %s197
      %s214 = sphi 0, %s198
    $region4: #{tpu_custom_call.1} parent=1 // loop_header_branch
      %19 = sbr.rel (%p17) target = $region8
    $region5: #{tpu_custom_call.1} parent=1 // loop_body
      %s21 = ssub.s32 %s16, 1
      %s22 = ssub.s32 %s16, 2
      %s29 = sadd.s32 1, %s24
      %p30 = scmp.ge.s32.totalorder %s29, 1
      %s31 = scalar_select %p30, 0, %s29
      %s32 = sadd.s32 1, %s23
      %s33 = scalar_select %p30, %s32, %s23
      %p34 = scmp.ge.s32.totalorder %s33, 2
      %s35 = scalar_select %p34, 0, %s33
      %s36 = ssub.s32 %s23, %s35
      %s37 = ssub.s32 %s24, %s31
      %s38 = sor.u32 %s36, %s37
      %p39 = scmp.eq.s32.totalorder %s38, 0
      %s41 = sadd.s32 %s40, 1
      %s42 = scalar_select %p39, %s40, %s41
      %p45 = pneg %p39
      %p46 = scmp.eq.s32.totalorder %s16, 1
      %p47 = por %p45, %p46
      %p48 = scmp.ne.s32.totalorder %s40, %s43
      %p49 = scmp.eq.s32.totalorder %s16, 0
      %p50 = por %p48, %p49
      %p51 = scmp.ne.s32.totalorder %s40, %s43
      %p52 = scmp.eq.s32.totalorder %s21, 1
      %p53 = por %p51, %p52
      %p54 = scmp.ne.s32.totalorder %s43, %s44
      %p55 = scmp.eq.s32.totalorder %s21, 0
      %p56 = por %p54, %p55
      %p57 = scmp.ne.s32.totalorder %s43, %s44
      %p58 = scmp.eq.s32.totalorder %s22, 1
      %p59 = por %p57, %p58
      %p61 = scmp.ne.s32.totalorder %s44, %s60
      %p62 = scmp.eq.s32.totalorder %s22, 0
      %p63 = por %p61, %p62
      %s65 = sadd.s32 %s64, 1
      %p68 = scmp.eq.s32.totalorder %s16, 1
      %p69 = scmp.ne.s32.totalorder %s64, %s66
      %p70 = scmp.eq.s32.totalorder %s16, 0
      %p71 = por %p69, %p70
      %p72 = scmp.ne.s32.totalorder %s64, %s66
      %p73 = scmp.eq.s32.totalorder %s21, 1
      %p74 = por %p72, %p73
      %p75 = scmp.ne.s32.totalorder %s66, %s67
      %p76 = scmp.eq.s32.totalorder %s21, 0
      %p77 = por %p75, %p76
      %p78 = scmp.ne.s32.totalorder %s66, %s67
      %p79 = scmp.eq.s32.totalorder %s22, 1
      %p80 = por %p78, %p79
      %p82 = scmp.ne.s32.totalorder %s67, %s81
      %p83 = scmp.eq.s32.totalorder %s22, 0
      %p84 = por %p82, %p83
      %s86 = sadd.s32 %s85, 1
      %p89 = scmp.eq.s32.totalorder %s16, 1
      %p90 = scmp.ne.s32.totalorder %s85, %s87
      %p91 = scmp.eq.s32.totalorder %s16, 0
      %p92 = por %p90, %p91
      %p93 = scmp.ne.s32.totalorder %s85, %s87
      %p94 = scmp.eq.s32.totalorder %s21, 1
      %p95 = por %p93, %p94
      %p96 = scmp.ne.s32.totalorder %s87, %s88
      %p97 = scmp.eq.s32.totalorder %s21, 0
      %p98 = por %p96, %p97
      %p99 = scmp.ne.s32.totalorder %s87, %s88
      %p100 = scmp.eq.s32.totalorder %s22, 1
      %p101 = por %p99, %p100
      %p103 = scmp.ne.s32.totalorder %s88, %s102
      %p104 = scmp.eq.s32.totalorder %s22, 0
      %p105 = por %p103, %p104
      %s107 = sadd.s32 %s106, 1
      %p110 = scmp.eq.s32.totalorder %s16, 1
      %p111 = scmp.ne.s32.totalorder %s106, %s108
      %p112 = scmp.eq.s32.totalorder %s16, 0
      %p113 = por %p111, %p112
      %p114 = scmp.ne.s32.totalorder %s106, %s108
      %p115 = scmp.eq.s32.totalorder %s21, 1
      %p116 = por %p114, %p115
      %p117 = scmp.ne.s32.totalorder %s108, %s109
      %p118 = scmp.eq.s32.totalorder %s21, 0
      %p119 = por %p117, %p118
      %p120 = scmp.ne.s32.totalorder %s108, %s109
      %p121 = scmp.eq.s32.totalorder %s22, 1
      %p122 = por %p120, %p121
      %p124 = scmp.ne.s32.totalorder %s109, %s123
      %p125 = scmp.eq.s32.totalorder %s22, 0
      %p126 = por %p124, %p125
      %s128 = sadd.s32 %s127, 1
      %p131 = scmp.eq.s32.totalorder %s16, 1
      %p132 = scmp.ne.s32.totalorder %s127, %s129
      %p133 = scmp.eq.s32.totalorder %s16, 0
      %p134 = por %p132, %p133
      %p135 = scmp.ne.s32.totalorder %s127, %s129
      %p136 = scmp.eq.s32.totalorder %s21, 1
      %p137 = por %p135, %p136
      %p138 = scmp.ne.s32.totalorder %s129, %s130
      %p139 = scmp.eq.s32.totalorder %s21, 0
      %p140 = por %p138, %p139
      %p141 = scmp.ne.s32.totalorder %s129, %s130
      %p142 = scmp.eq.s32.totalorder %s22, 1
      %p143 = por %p141, %p142
      %p145 = scmp.ne.s32.totalorder %s130, %s144
      %p146 = scmp.eq.s32.totalorder %s22, 0
      %p147 = por %p145, %p146
      %s149 = sadd.s32 %s148, 1
      %p152 = scmp.eq.s32.totalorder %s16, 1
      %p153 = scmp.ne.s32.totalorder %s148, %s150
      %p154 = scmp.eq.s32.totalorder %s16, 0
      %p155 = por %p153, %p154
      %p156 = scmp.ne.s32.totalorder %s148, %s150
      %p157 = scmp.eq.s32.totalorder %s21, 1
      %p158 = por %p156, %p157
      %p159 = scmp.ne.s32.totalorder %s150, %s151
      %p160 = scmp.eq.s32.totalorder %s21, 0
      %p161 = por %p159, %p160
      %p162 = scmp.ne.s32.totalorder %s150, %s151
      %p163 = scmp.eq.s32.totalorder %s22, 1
      %p164 = por %p162, %p163
      %p166 = scmp.ne.s32.totalorder %s151, %s165
      %p167 = scmp.eq.s32.totalorder %s22, 0
      %p168 = por %p166, %p167
      %s170 = sadd.s32 %s169, 1
      %p173 = scmp.eq.s32.totalorder %s16, 1
      %p174 = scmp.ne.s32.totalorder %s169, %s171
      %p175 = scmp.eq.s32.totalorder %s16, 0
      %p176 = por %p174, %p175
      %p177 = scmp.ne.s32.totalorder %s169, %s171
      %p178 = scmp.eq.s32.totalorder %s21, 1
      %p179 = por %p177, %p178
      %p180 = scmp.ne.s32.totalorder %s171, %s172
      %p181 = scmp.eq.s32.totalorder %s21, 0
      %p182 = por %p180, %p181
      %p183 = scmp.ne.s32.totalorder %s171, %s172
      %p184 = scmp.eq.s32.totalorder %s22, 1
      %p185 = por %p183, %p184
      %p187 = scmp.ne.s32.totalorder %s172, %s186
      %p188 = scmp.eq.s32.totalorder %s22, 0
      %p189 = por %p187, %p188
      %s190 = ssub.s32 %s23, %s35
      %s191 = ssub.s32 %s24, %s31
      %s192 = sor.u32 %s190, %s191
      %p193 = scmp.eq.s32.totalorder %s192, 0
      %s195 = sadd.s32 %s194, 1
      %s196 = scalar_select %p193, %s194, %s195
      %p199 = pneg %p193
      %p200 = scmp.eq.s32.totalorder %s16, 1
      %p201 = por %p199, %p200
      %p202 = scmp.ne.s32.totalorder %s194, %s197
      %p203 = scmp.eq.s32.totalorder %s16, 0
      %p204 = por %p202, %p203
      %p205 = scmp.ne.s32.totalorder %s194, %s197
      %p206 = scmp.eq.s32.totalorder %s21, 1
      %p207 = por %p205, %p206
      %p208 = scmp.ne.s32.totalorder %s197, %s198
      %p209 = scmp.eq.s32.totalorder %s21, 0
      %p210 = por %p208, %p209
      %p211 = scmp.ne.s32.totalorder %s197, %s198
      %p212 = scmp.eq.s32.totalorder %s22, 1
      %p213 = por %p211, %p212
      %p215 = scmp.ne.s32.totalorder %s198, %s214
      %p216 = scmp.eq.s32.totalorder %s22, 0
      %p217 = por %p215, %p216
      %p218 = scmp.le.s32.totalorder 1, %s16
      %p219 = scmp.lt.s32.totalorder %s16, 3
      %p220 = pnand %p218, %p219
      %p221 = pneg %p220
      // Predicated region
      $region9: #{tpu_custom_call.1} parent=5 // pred_check
        _
      $region10: #{tpu_custom_call.1} parent=5 // pred_check_branch
        %223 = sbr.rel (%p220) target = $region12
      $region11: #{tpu_custom_call.1} parent=5 // pred_region
        %s224 = ssub.s32 %s16, 1
        // Predicated region
        $region13: #{tpu_custom_call.1} parent=11 // pred_check
          %p225 = pneg %p77
        $region14: #{tpu_custom_call.1} parent=11 // pred_check_branch
          %227 = sbr.rel (%p225) target = $region16
        $region15: #{tpu_custom_call.1} parent=11 // pred_region
          _
        $region16: #{tpu_custom_call.1} parent=11 // pred_fallthru
          _
        // Predicated region
        $region17: #{tpu_custom_call.1} parent=11 // pred_check
          %p228 = pneg %p98
        $region18: #{tpu_custom_call.1} parent=11 // pred_check_branch
          %230 = sbr.rel (%p228) target = $region20
        $region19: #{tpu_custom_call.1} parent=11 // pred_region
          _
        $region20: #{tpu_custom_call.1} parent=11 // pred_fallthru
          _
        // Predicated region
        $region21: #{tpu_custom_call.1} parent=11 // pred_check
          %p231 = pneg %p119
        $region22: #{tpu_custom_call.1} parent=11 // pred_check_branch
          %233 = sbr.rel (%p231) target = $region24
        $region23: #{tpu_custom_call.1} parent=11 // pred_region
          _
        $region24: #{tpu_custom_call.1} parent=11 // pred_fallthru
          _
        // Predicated region
        $region25: #{tpu_custom_call.1} parent=11 // pred_check
          %p234 = pneg %p140
        $region26: #{tpu_custom_call.1} parent=11 // pred_check_branch
          %236 = sbr.rel (%p234) target = $region28
        $region27: #{tpu_custom_call.1} parent=11 // pred_region
          _
        $region28: #{tpu_custom_call.1} parent=11 // pred_fallthru
          _
        // Predicated region
        $region29: #{tpu_custom_call.1} parent=11 // pred_check
          %p237 = pneg %p161
        $region30: #{tpu_custom_call.1} parent=11 // pred_check_branch
          %239 = sbr.rel (%p237) target = $region32
        $region31: #{tpu_custom_call.1} parent=11 // pred_region
          _
        $region32: #{tpu_custom_call.1} parent=11 // pred_fallthru
          _
        // Predicated region
        $region33: #{tpu_custom_call.1} parent=11 // pred_check
          %p240 = pneg %p182
        $region34: #{tpu_custom_call.1} parent=11 // pred_check_branch
          %242 = sbr.rel (%p240) target = $region36
        $region35: #{tpu_custom_call.1} parent=11 // pred_region
          _
        $region36: #{tpu_custom_call.1} parent=11 // pred_fallthru
          _
      $region12: #{tpu_custom_call.1} parent=5 // pred_fallthru
        _
      %p243 = scmp.lt.s32.totalorder %s16, 2
      // Predicated region
      $region37: #{tpu_custom_call.1} parent=5 // pred_check
        %p244 = pneg %p243
      $region38: #{tpu_custom_call.1} parent=5 // pred_check_branch
        %246 = sbr.rel (%p244) target = $region40
      $region39: #{tpu_custom_call.1} parent=5 // pred_region
        // Predicated region
        $region41: #{tpu_custom_call.1} parent=39 // pred_check
          %p247 = pneg %p50
        $region42: #{tpu_custom_call.1} parent=39 // pred_check_branch
          %249 = sbr.rel (%p247) target = $region44
        $region43: #{tpu_custom_call.1} parent=39 // pred_region
          %p250 = scmp.lt.s32.totalorder %s23, 1
          %s251 = scalar_select %p250, %s23, 1
          %p252 = scmp.lt.s32.totalorder %s24, 0
          %s253 = scalar_select %p252, %s24, 0
          %s254 = sadd.s32 %s253, %s251
          %s255 = smul.addr %s254, 4
          %s256 = scalar_lea.vmem %s0, %s255
        $region44: #{tpu_custom_call.1} parent=39 // pred_fallthru
          _
      $region40: #{tpu_custom_call.1} parent=5 // pred_fallthru
        _
      %p257 = scmp.le.s32.totalorder 1, %s16
      %p258 = scmp.lt.s32.totalorder %s16, 3
      %p259 = pnand %p257, %p258
      %p260 = pneg %p259
      // Predicated region
      $region45: #{tpu_custom_call.1} parent=5 // pred_check
        _
      $region46: #{tpu_custom_call.1} parent=5 // pred_check_branch
        %262 = sbr.rel (%p259) target = $region48
      $region47: #{tpu_custom_call.1} parent=5 // pred_region
        %s263 = ssub.s32 %s16, 1
        %p264 = scmp.lt.s32.totalorder %s25, 1
        %s265 = scalar_select %p264, %s25, 1
        %p266 = scmp.lt.s32.totalorder %s26, 0
        %s267 = scalar_select %p266, %s26, 0
        %s268 = sadd.s32 %s267, %s265
        %s269 = smul.addr %s268, 4
        %s270 = scalar_lea.vmem %s0, %s269
        %p271 = pneg %p56
        %p272 = pneg %p53
        %p273 = pneg %p77
        %p274 = pneg %p74
        %p275 = pneg %p98
        %p276 = pneg %p95
        %p277 = pneg %p119
        %p278 = pneg %p116
        %p279 = pneg %p140
        %p280 = pneg %p137
        %p281 = pneg %p161
        %p282 = pneg %p158
        %p283 = pneg %p182
        %p284 = pneg %p179
        %p285 = pneg %p210
        %p286 = pneg %p207
        %s287 = sand.u32 %s197, 1
        %s288 = scalar_lea.sflag [#allocation5], %s287
        %s289 = sand.u32 %s197, 1
        %s290 = smul.addr %s289, 8
        %s291 = scalar_lea.vmem [#allocation4], %s290
        %p292 = scmp.lt.s32.totalorder %s25, 1
        %s293 = scalar_select %p292, %s25, 1
        %p294 = scmp.lt.s32.totalorder %s26, 0
        %s295 = scalar_select %p294, %s26, 0
        %s296 = sadd.s32 %s295, %s293
        %s297 = smul.addr %s296, 4
        %s298 = scalar_lea.vmem %s0, %s297
        %p299 = scmp.eq.s32.totalorder %s26, 0
        // Predicated region
        $region49: #{tpu_custom_call.1} parent=47 // pred_check
          %p300 = pneg %p299
        $region50: #{tpu_custom_call.1} parent=47 // pred_check_branch
          %302 = sbr.rel (%p300) target = $region52
        $region51: #{tpu_custom_call.1} parent=47 // pred_region
          %vm303 = vcmask 27648
          %304 = vst.msk [vmem:[#allocation2] sm:$0xf] %vm303, 0.0
          %vm305 = vcmask 31744
          %306 = vst.msk [vmem:[#allocation3] sm:$0xff] %vm305, 0.0
        $region52: #{tpu_custom_call.1} parent=47 // pred_fallthru
          _
        %v307 = vld [vmem:[%s298] sm:$0xf]
        %v308 = vld [vmem:[#allocation2] sm:$0xf]
        %310 = vrot.lane.b32.xlu0 %v307, 4
        %v311 = vpop.permute.xlu0 %310
        %vm313 = vcmask 31744
        %v314 = vsel %vm313, %v308, %v311
        %v316 = vrot.slane %v314, 4
        %317 = vrot.lane.b32.xlu0 %v316, 126
        %v318 = vpop.permute.xlu0 %317
        %320 = vrot.lane.b32.xlu0 %v314, 124
        %v321 = vpop.permute.xlu0 %320
        %vm322 = vcmask 1043456
        %v323 = vsel %vm322, %v314, %v318
        %v324 = vld [vmem:[%s1] sm:$0xff]
        %v325 = vld [vmem:[%s2] sm:$0xff]
        %327 = vset.pattern.permute.xlu0 0
        %328 = vperm.xlu0 %327, %v325
        %v329 = vpop.permute.xlu0 %328
        %vm331 = vcmask 97280
        %v333 = vsel %vm331, %v324, 0
        %v335 = vsel %vm322, %v321, 0
        %337 = vmatprep.subr.mxu0 0.0
        %338 = vmatpush1.msra.mxu0 0.0
        %339 = vmatprep.subr.mxu0 0.0
        %340 = vmatpush1.msra.mxu0 0.0
        %341 = vmatprep.subr.mxu0 0.0
        %342 = vmatpush1.msra.mxu0 0.0
        %343 = vmatprep.subr.mxu0 0.0
        %344 = vmatpush1.msra.mxu0 0.0
        %345 = vmatprep.subr.mxu0 0.0
        %346 = vmatpush1.msra.mxu0 0.0
        %347 = vmatprep.subr.mxu0 0.0
        %348 = vmatpush1.msra.mxu0 0.0
        %349 = vmatprep.subr.mxu0 0.0
        %350 = vmatpush1.msra.mxu0 0.0
        %351 = vmatprep.subr.mxu0 0.0
        %352 = vmatpush1.msra.mxu0 0.0
        %353 = vmatprep.subr.mxu0 0.0
        %354 = vmatpush1.msra.mxu0 0.0
        %355 = vmatprep.subr.mxu0 0.0
        %356 = vmatpush1.msra.mxu0 0.0
        %357 = vmatprep.subr.mxu0 0.0
        %358 = vmatpush1.msra.mxu0 0.0
        %359 = vmatprep.subr.mxu0 0.0
        %360 = vmatpush1.msra.mxu0 0.0
        %361 = vmatprep.subr.mxu0 0.0
        %362 = vmatpush1.msra.mxu0 0.0
        %363 = vmatprep.subr.mxu0 0.0
        %364 = vmatpush1.msra.mxu0 0.0
        %365 = vmatprep.subr.mxu0 0.0
        %366 = vmatpush1.msra.mxu0 %v335
        %367 = vmatprep.subr.mxu0 0.0
        %368 = vmatpush1.msra.mxu0 %v323
        %369 = vmatprep.subr.mxu0 0.0
        %370 = vmatpush2.msra.mxu0 0.0
        %371 = vmatprep.subr.mxu0 0.0
        %372 = vmatpush2.msra.mxu0 0.0
        %373 = vmatprep.subr.mxu0 0.0
        %374 = vmatpush2.msra.mxu0 0.0
        %375 = vmatprep.subr.mxu0 0.0
        %376 = vmatpush2.msra.mxu0 0.0
        %377 = vmatprep.subr.mxu0 0.0
        %378 = vmatpush2.msra.mxu0 0.0
        %379 = vmatprep.subr.mxu0 0.0
        %380 = vmatpush2.msra.mxu0 0.0
        %381 = vmatprep.subr.mxu0 0.0
        %382 = vmatpush2.msra.mxu0 0.0
        %383 = vmatprep.subr.mxu0 0.0
        %384 = vmatpush2.msra.mxu0 0.0
        %385 = vmatprep.subr.mxu0 0.0
        %386 = vmatpush2.msra.mxu0 0.0
        %387 = vmatprep.subr.mxu0 0.0
        %388 = vmatpush2.msra.mxu0 0.0
        %389 = vmatprep.subr.mxu0 0.0
        %390 = vmatpush2.msra.mxu0 0.0
        %391 = vmatprep.subr.mxu0 0.0
        %392 = vmatpush2.msra.mxu0 0.0
        %393 = vmatprep.subr.mxu0 0.0
        %394 = vmatpush2.msra.mxu0 0.0
        %395 = vmatprep.subr.mxu0 0.0
        %396 = vmatpush2.msra.mxu0 0.0
        %397 = vmatprep.subr.mxu0 0.0
        %398 = vmatpush2.msra.mxu0 0.0
        %399 = vmatprep.subr.mxu0 0.0
        %400 = vmatpush2.msra.mxu0 0.0
        %401 = vmatprep.mubr.f32.mxu0 0.0
        %402 = vmatmul.mubr.f32.gmra.mxu0 %v333
        %v403 = vpop.f32.mrf.mxu0
        %v404 = vadd.f32 %v329, %v403
        %v405 = vpop.f32.mrf.mxu0
        %406 = vdwg.mxu0
        %v407 = vmax.f32 %v404, 0.0
        %v408 = vld [vmem:[#allocation3] sm:$0xff]
        %410 = vrot.lane.b32.xlu0 %v407, 4
        %v411 = vpop.permute.xlu0 %410
        %v413 = vsel %vm313, %v408, %v411
        %415 = vrot.lane.b32.xlu0 %v413, 126
        %v416 = vpop.permute.xlu0 %415
        %418 = vrot.lane.b32.xlu0 %v413, 124
        %v419 = vpop.permute.xlu0 %418
        %v421 = vld [vmem:[%s3] sm:$0xff]
        %v422 = vld [vmem:[%s4] sm:$0xff]
        %424 = vset.pattern.permute.xlu0 0
        %425 = vperm.xlu0 %424, %v422
        %v426 = vpop.permute.xlu0 %425
        %vm428 = vcmask 195584
        %v430 = vsel %vm428, %v421, 0
        %432 = vmatprep.subr.mxu0 0.0
        %433 = vmatpush1.msra.mxu0 0.0
        %434 = vmatprep.subr.mxu0 0.0
        %435 = vmatpush1.msra.mxu0 0.0
        %436 = vmatprep.subr.mxu0 0.0
        %437 = vmatpush1.msra.mxu0 0.0
        %438 = vmatprep.subr.mxu0 0.0
        %439 = vmatpush1.msra.mxu0 0.0
        %440 = vmatprep.subr.mxu0 0.0
        %441 = vmatpush1.msra.mxu0 0.0
        %442 = vmatprep.subr.mxu0 0.0
        %443 = vmatpush1.msra.mxu0 0.0
        %444 = vmatprep.subr.mxu0 0.0
        %445 = vmatpush1.msra.mxu0 0.0
        %446 = vmatprep.subr.mxu0 0.0
        %447 = vmatpush1.msra.mxu0 0.0
        %448 = vmatprep.subr.mxu0 0.0
        %449 = vmatpush1.msra.mxu0 0.0
        %450 = vmatprep.subr.mxu0 0.0
        %451 = vmatpush1.msra.mxu0 0.0
        %452 = vmatprep.subr.mxu0 0.0
        %453 = vmatpush1.msra.mxu0 0.0
        %454 = vmatprep.subr.mxu0 0.0
        %455 = vmatpush1.msra.mxu0 0.0
        %456 = vmatprep.subr.mxu0 0.0
        %457 = vmatpush1.msra.mxu0 0.0
        %458 = vmatprep.subr.mxu0 0.0
        %459 = vmatpush1.msra.mxu0 %v419
        %460 = vmatprep.subr.mxu0 0.0
        %461 = vmatpush1.msra.mxu0 %v416
        %462 = vmatprep.subr.mxu0 0.0
        %463 = vmatpush1.msra.mxu0 %v413
        %464 = vmatprep.subr.mxu0 0.0
        %465 = vmatpush2.msra.mxu0 0.0
        %466 = vmatprep.subr.mxu0 0.0
        %467 = vmatpush2.msra.mxu0 0.0
        %468 = vmatprep.subr.mxu0 0.0
        %469 = vmatpush2.msra.mxu0 0.0
        %470 = vmatprep.subr.mxu0 0.0
        %471 = vmatpush2.msra.mxu0 0.0
        %472 = vmatprep.subr.mxu0 0.0
        %473 = vmatpush2.msra.mxu0 0.0
        %474 = vmatprep.subr.mxu0 0.0
        %475 = vmatpush2.msra.mxu0 0.0
        %476 = vmatprep.subr.mxu0 0.0
        %477 = vmatpush2.msra.mxu0 0.0
        %478 = vmatprep.subr.mxu0 0.0
        %479 = vmatpush2.msra.mxu0 0.0
        %480 = vmatprep.subr.mxu0 0.0
        %481 = vmatpush2.msra.mxu0 0.0
        %482 = vmatprep.subr.mxu0 0.0
        %483 = vmatpush2.msra.mxu0 0.0
        %484 = vmatprep.subr.mxu0 0.0
        %485 = vmatpush2.msra.mxu0 0.0
        %486 = vmatprep.subr.mxu0 0.0
        %487 = vmatpush2.msra.mxu0 0.0
        %488 = vmatprep.subr.mxu0 0.0
        %489 = vmatpush2.msra.mxu0 0.0
        %490 = vmatprep.subr.mxu0 0.0
        %491 = vmatpush2.msra.mxu0 0.0
        %492 = vmatprep.subr.mxu0 0.0
        %493 = vmatpush2.msra.mxu0 0.0
        %494 = vmatprep.subr.mxu0 0.0
        %495 = vmatpush2.msra.mxu0 0.0
        %496 = vmatprep.mubr.f32.mxu0 0.0
        %497 = vmatmul.mubr.f32.gmra.mxu0 %v430
        %v498 = vpop.f32.mrf.mxu0
        %v499 = vadd.f32 %v426, %v498
        %v500 = vpop.f32.mrf.mxu0
        %501 = vdwg.mxu0
        %v502 = vmax.f32 %v499, 0.0
        %v503 = vld [vmem:[%s5] sm:$0xff]
        %v504 = vld [vmem:[%s6] sm:$0xff]
        %506 = vset.pattern.permute.xlu0 0
        %507 = vperm.xlu0 %506, %v504
        %v508 = vpop.permute.xlu0 %507
        %v511 = vsel %vm313, %v503, 0
        %v513 = vsel %vm322, %v307, 0
        %515 = vmatprep.subr.mxu0 0.0
        %516 = vmatpush1.msra.mxu0 0.0
        %517 = vmatprep.subr.mxu0 0.0
        %518 = vmatpush1.msra.mxu0 0.0
        %519 = vmatprep.subr.mxu0 0.0
        %520 = vmatpush1.msra.mxu0 0.0
        %521 = vmatprep.subr.mxu0 0.0
        %522 = vmatpush1.msra.mxu0 0.0
        %523 = vmatprep.subr.mxu0 0.0
        %524 = vmatpush1.msra.mxu0 0.0
        %525 = vmatprep.subr.mxu0 0.0
        %526 = vmatpush1.msra.mxu0 0.0
        %527 = vmatprep.subr.mxu0 0.0
        %528 = vmatpush1.msra.mxu0 0.0
        %529 = vmatprep.subr.mxu0 0.0
        %530 = vmatpush1.msra.mxu0 0.0
        %531 = vmatprep.subr.mxu0 0.0
        %532 = vmatpush1.msra.mxu0 0.0
        %533 = vmatprep.subr.mxu0 0.0
        %534 = vmatpush1.msra.mxu0 0.0
        %535 = vmatprep.subr.mxu0 0.0
        %536 = vmatpush1.msra.mxu0 0.0
        %537 = vmatprep.subr.mxu0 0.0
        %538 = vmatpush1.msra.mxu0 0.0
        %539 = vmatprep.subr.mxu0 0.0
        %540 = vmatpush1.msra.mxu0 0.0
        %541 = vmatprep.subr.mxu0 0.0
        %542 = vmatpush1.msra.mxu0 0.0
        %543 = vmatprep.subr.mxu0 0.0
        %544 = vmatpush1.msra.mxu0 0.0
        %545 = vmatprep.subr.mxu0 0.0
        %546 = vmatpush1.msra.mxu0 %v513
        %547 = vmatprep.subr.mxu0 0.0
        %548 = vmatpush2.msra.mxu0 0.0
        %549 = vmatprep.subr.mxu0 0.0
        %550 = vmatpush2.msra.mxu0 0.0
        %551 = vmatprep.subr.mxu0 0.0
        %552 = vmatpush2.msra.mxu0 0.0
        %553 = vmatprep.subr.mxu0 0.0
        %554 = vmatpush2.msra.mxu0 0.0
        %555 = vmatprep.subr.mxu0 0.0
        %556 = vmatpush2.msra.mxu0 0.0
        %557 = vmatprep.subr.mxu0 0.0
        %558 = vmatpush2.msra.mxu0 0.0
        %559 = vmatprep.subr.mxu0 0.0
        %560 = vmatpush2.msra.mxu0 0.0
        %561 = vmatprep.subr.mxu0 0.0
        %562 = vmatpush2.msra.mxu0 0.0
        %563 = vmatprep.subr.mxu0 0.0
        %564 = vmatpush2.msra.mxu0 0.0
        %565 = vmatprep.subr.mxu0 0.0
        %566 = vmatpush2.msra.mxu0 0.0
        %567 = vmatprep.subr.mxu0 0.0
        %568 = vmatpush2.msra.mxu0 0.0
        %569 = vmatprep.subr.mxu0 0.0
        %570 = vmatpush2.msra.mxu0 0.0
        %571 = vmatprep.subr.mxu0 0.0
        %572 = vmatpush2.msra.mxu0 0.0
        %573 = vmatprep.subr.mxu0 0.0
        %574 = vmatpush2.msra.mxu0 0.0
        %575 = vmatprep.subr.mxu0 0.0
        %576 = vmatpush2.msra.mxu0 0.0
        %577 = vmatprep.subr.mxu0 0.0
        %578 = vmatpush2.msra.mxu0 0.0
        %579 = vmatprep.mubr.f32.mxu0 0.0
        %580 = vmatmul.mubr.f32.gmra.mxu0 %v511
        %v581 = vpop.f32.mrf.mxu0
        %v582 = vadd.f32 %v508, %v581
        %v583 = vpop.f32.mrf.mxu0
        %584 = vdwg.mxu0
        %v585 = vadd.f32 %v502, %v582
        %v586 = vmax.f32 %v585, 0.0
        %vm587 = vcmask 130048
        %588 = vst.msk [vmem:[%s291] sm:$0xff] %vm587, %v586
        %589 = vrot.lane.b32.xlu0 %v314, 112
        %v590 = vpop.permute.xlu0 %589
        %vm592 = vcmask 27648
        %593 = vst.msk [vmem:[#allocation2] sm:$0xf] %vm592, %v590
        %594 = vrot.lane.b32.xlu0 %v413, 112
        %v595 = vpop.permute.xlu0 %594
        %597 = vst.msk [vmem:[#allocation3] sm:$0xff] %vm313, %v595
        %s598 = sand.u32 %s197, 1
        %s599 = scalar_lea.sflag [#allocation5], %s598
        %s600 = sand.u32 %s197, 1
        %s601 = smul.addr %s600, 8
        %s602 = scalar_lea.vmem [#allocation4], %s601
        // Predicated region
        $region53: #{tpu_custom_call.1} parent=47 // pred_check
          %p603 = pneg %p207
        $region54: #{tpu_custom_call.1} parent=47 // pred_check_branch
          %605 = sbr.rel (%p603) target = $region56
        $region55: #{tpu_custom_call.1} parent=47 // pred_region
          %s607 = ssub.s32 128, 128
          %608 = vsyncadd %s599, %s607
          %s609 = sadd.s32 %s26, %s25
          %s610 = smul.addr %s609, 128
          %s611 = scalar_lea.hbm %s7, %s610
          %s613 = sshll.u32 %s602, 4
          %s614 = int_to_ptr.vmem [resolvable:$true] %s613
          %616 = dma.vmem_to_hbm [thread:$0]  %s614, 128, %s611, %s599
        $region56: #{tpu_custom_call.1} parent=47 // pred_fallthru
          _
      $region48: #{tpu_custom_call.1} parent=5 // pred_fallthru
        _
      %p617 = scmp.le.s32.totalorder 2, %s16
      // Predicated region
      $region57: #{tpu_custom_call.1} parent=5 // pred_check
        %p618 = pneg %p617
      $region58: #{tpu_custom_call.1} parent=5 // pred_check_branch
        %620 = sbr.rel (%p618) target = $region60
      $region59: #{tpu_custom_call.1} parent=5 // pred_region
        %s621 = ssub.s32 %s16, 2
        // Predicated region
        $region61: #{tpu_custom_call.1} parent=59 // pred_check
          %p622 = pneg %p213
        $region62: #{tpu_custom_call.1} parent=59 // pred_check_branch
          %624 = sbr.rel (%p622) target = $region64
        $region63: #{tpu_custom_call.1} parent=59 // pred_region
          %s625 = sand.u32 %s198, 1
          %s626 = scalar_lea.sflag [#allocation5], %s625
          %s627 = sand.u32 %s198, 1
          %s628 = smul.addr %s627, 8
          %s629 = scalar_lea.vmem [#allocation4], %s628
          %630 = dma.done %s626, 128
        $region64: #{tpu_custom_call.1} parent=59 // pred_fallthru
          _
      $region60: #{tpu_custom_call.1} parent=5 // pred_fallthru
        _
    $region6: #{tpu_custom_call.1} parent=1 // loop_footer
      %s20 = sadd.s32 1, %s16
    $region7: #{tpu_custom_call.1} parent=1 // loop_footer_branch
      %15 = sbr.rel target = $region3
    $region8: #{tpu_custom_call.1} parent=1 // loop_exit
      _
    %631 = vsyncpa [#allocation5], 1
    %s632 = scalar_lea.sflag [#allocation5], 1
    %633 = vsyncpa %s632, 1

</llo_original>
